<compile_context>
chip_gen: v7x
topology: tpu7x:2x2x1
jax: 0.10.0
libtpu: 0.0.40
codegen_flags: <defaults>
</compile_context>

<pallas_src>
import functools

import jax
import jax.numpy as jnp
from jax.experimental import pallas as pl
from jax.experimental.pallas import tpu as pltpu


def _int_pow(x, n: int):
    """x**n for a static Python integer n >= 1, using only VPU multiplies (no EUP)."""
    result = None
    base = x
    while n > 0:
        if n & 1:
            result = base if result is None else result * base
        n >>= 1
        if n:
            base = base * base
    return result


def _gem_linear_kernel(x_ref, w_ref, b_ref, o_ref, acc_ref, *,
                       pool_param, c_tile, spatial_axis):
    # x_ref : (TN, TC, HW) for NCHW input, (TN, HW, TC) for NHWC input
    # w_ref : (C, C_out)   transposed Linear weight, whole & grid-invariant in VMEM
    # b_ref : (1, C_out)
    # o_ref : (TN, C_out)  output block (same block across the channel grid axis)
    # acc_ref: (TN, C_out) f32 accumulator scratch
    j = pl.program_id(1)
    nc = pl.num_programs(1)

    @pl.when(j == 0)
    def _init():
        acc_ref[...] = jnp.zeros_like(acc_ref)

    p = float(pool_param)
    x = x_ref[...].astype(jnp.float32)
    xc = jnp.maximum(x, 1e-6)                       # clamp(min=1e-6)

    if p == 1.0:
        pooled = jnp.mean(xc, axis=spatial_axis)    # AvgPool2d path
    else:
        if p.is_integer() and p >= 1.0:
            xp = _int_pow(xc, int(p))               # pure VPU multiplies
        else:
            xp = jnp.exp(jnp.log(xc) * p)           # xc >= 1e-6 > 0, safe
        g = jnp.mean(xp, axis=spatial_axis)         # (TN, TC)
        pooled = jnp.exp(jnp.log(g) * (1.0 / p))    # root only on the small pooled tile

    w_start = pl.multiple_of(j * c_tile, c_tile)
    w_blk = w_ref[pl.ds(w_start, c_tile), :].astype(jnp.float32)   # (TC, C_out)
    acc_ref[...] += jnp.dot(pooled, w_blk, preferred_element_type=jnp.float32)

    @pl.when(j == nc - 1)
    def _finish():
        o_ref[...] = (acc_ref[...] + b_ref[...].astype(jnp.float32)).astype(o_ref.dtype)


def _pick_batch_tile(n: int, max_tile: int) -> int:
    if n <= max_tile:
        return n                      # single batch block; tn == N is always a legal block dim
    # Multiple blocks: tn must be a multiple of 8 (output BlockSpec rule); prefer an
    # even number of grid steps so both v7x TensorCores get equal work.
    cap = max(8, max_tile - max_tile % 8)
    for tn in range(cap, 7, -8):
        if pl.cdiv(n, tn) % 2 == 0:
            return tn
    return cap


def _pick_c_tile(c: int, max_tile: int, multiple: int) -> int:
    if c <= max_tile:
        return c
    best = None
    for tc in range(multiple, max_tile + 1, multiple):
        if c % tc == 0:
            best = tc                 # largest exact divisor (no padded/garbage channels)
    return best if best is not None else c


def gem_pool_linear(x, weight, bias, pool_param=3.0, *,
                    data_format="NCHW", batch_tile=None, c_tile=None, out_dtype=None):
    """Fused GeM pooling + Linear.

    x: (N, C, H, W) if data_format == "NCHW" (PyTorch layout), else (N, H, W, C).
    weight: (C_out, C) PyTorch Linear layout; bias: (C_out,).
    bf16 x / weight are streamed as-is (f32 accumulation inside the kernel).
    """
    if data_format == "NCHW":
        N, C, H, W = x.shape
        HW = H * W
        xr = x.reshape(N, C, HW)          # free reshape, no HBM copy, no pad
        spatial_axis = 2
        c_multiple = 8                    # TC sits on sublanes
    elif data_format == "NHWC":
        N, H, W, C = x.shape
        HW = H * W
        xr = x.reshape(N, HW, C)          # channels-last: C lane-dense, HW on sublanes
        spatial_axis = 1
        c_multiple = 128                  # TC sits on lanes
    else:
        raise ValueError(f"unknown data_format {data_format!r}")

    C_out, C_w = weight.shape
    assert C_w == C, (C_w, C)

    itemsize = jnp.dtype(x.dtype).itemsize
    tn = _pick_batch_tile(N, batch_tile if batch_tile is not None
                          else (64 if itemsize <= 2 else 32))
    tc = _pick_c_tile(C, c_tile if c_tile is not None else 256, c_multiple)
    n_tiles = pl.cdiv(N, tn)
    nc = C // tc

    # One-time small copies; hoist out of the hot path for repeated small-batch calls.
    wt = weight.T                         # (C, C_out)
    b2 = bias.reshape(1, C_out)

    if out_dtype is None:
        out_dtype = jnp.result_type(x.dtype, weight.dtype, bias.dtype)

    if data_format == "NCHW":
        x_spec = pl.BlockSpec((tn, tc, HW), lambda i, j: (i, j, 0))
    else:
        x_spec = pl.BlockSpec((tn, HW, tc), lambda i, j: (i, 0, j))

    out = pl.pallas_call(
        functools.partial(_gem_linear_kernel, pool_param=float(pool_param),
                          c_tile=tc, spatial_axis=spatial_axis),
        out_shape=jax.ShapeDtypeStruct((N, C_out), out_dtype),
        grid_spec=pltpu.PrefetchScalarGridSpec(
            num_scalar_prefetch=0,
            grid=(n_tiles, nc),
            in_specs=[
                x_spec,
                # Whole weight / bias, grid-invariant blocks: DMA'd once, stay resident.
                pl.BlockSpec((C, C_out), lambda i, j: (0, 0)),
                pl.BlockSpec((1, C_out), lambda i, j: (0, 0)),
            ],
            out_specs=pl.BlockSpec((tn, C_out), lambda i, j: (i, 0)),
            scratch_shapes=[pltpu.VMEM((tn, C_out), jnp.float32)],
        ),
        compiler_params=pltpu.CompilerParams(
            dimension_semantics=("parallel", "arbitrary"),
            # Explicit scoped-VMEM budget: covers TN=32/64, TC=256 + resident weight at
            # ResNet50 head dims on v5e/v6e, and stays under v7x's 64 MiB physical VMEM.
            vmem_limit_bytes=48 * 1024 * 1024,
        ),
    )(xr, wt, b2)
    return out


def _reference(x_nchw, weight, bias, pool_param=3.0):
    """Pure-JAX replica of GlobalGeMPool2d + Linear (PyTorch semantics), f32 compute."""
    N, C, H, W = x_nchw.shape
    xr = x_nchw.reshape(N, C, H * W).astype(jnp.float32)
    mean = jnp.mean(jnp.clip(xr, 1e-6, None) ** pool_param, axis=2)
    pooled = mean ** (1.0 / pool_param)
    return pooled @ weight.astype(jnp.float32).T + bias.astype(jnp.float32)


if __name__ == "__main__":
    # Small stand-ins for the real (C=2048, HW=7x7, C_out=512) head dims.
    C, H, W, C_out = 256, 7, 7, 128
    pool_param = 3.0

    key = jax.random.PRNGKey(0)
    kx, kw, kb, kx2 = jax.random.split(key, 4)

    bound = 1.0 / (C ** 0.5)
    weight = jax.random.uniform(kw, (C_out, C), minval=-bound, maxval=bound, dtype=jnp.float32)
    bias = jax.random.uniform(kb, (C_out,), minval=-bound, maxval=bound, dtype=jnp.float32)

    # 1) Small batch, single block (NCHW, f32).  Backbone outputs (post-ReLU) are >= 0.
    x = jax.random.uniform(kx, (2, C, H, W), dtype=jnp.float32)
    out = jax.block_until_ready(gem_pool_linear(x, weight, bias, pool_param))
    ref = _reference(x, weight, bias, pool_param)
    assert out.shape == (2, C_out)
    assert jnp.allclose(out, ref, atol=1e-4, rtol=1e-4), "mismatch (case 1)"

    # 2) Ragged batch + batch/channel tiling, no host-side pad (grid = (3, 4)).
    x = jax.random.uniform(kx, (20, C, H, W), dtype=jnp.float32)
    out = jax.block_until_ready(
        gem_pool_linear(x, weight, bias, pool_param, batch_tile=8, c_tile=64))
    ref = _reference(x, weight, bias, pool_param)
    assert out.shape == (20, C_out)
    assert jnp.allclose(out, ref, atol=1e-4, rtol=1e-4), "mismatch (case 2)"

    # 3) Channels-last consumption (lane-dense C, sublane HW reduce).
    x_nhwc = jnp.transpose(x, (0, 2, 3, 1))
    out = jax.block_until_ready(
        gem_pool_linear(x_nhwc, weight, bias, pool_param,
                        data_format="NHWC", batch_tile=8, c_tile=128))
    assert jnp.allclose(out, ref, atol=1e-4, rtol=1e-4), "mismatch (case 3)"

    # 4) bf16 streaming (half the HBM bytes; f32 accumulation inside the kernel).
    xb = jax.random.uniform(kx2, (4, C, H, W), dtype=jnp.float32)
    out = jax.block_until_ready(
        gem_pool_linear(xb.astype(jnp.bfloat16), weight.astype(jnp.bfloat16), bias, pool_param))
    ref = _reference(xb.astype(jnp.bfloat16), weight.astype(jnp.bfloat16), bias, pool_param)
    assert jnp.allclose(out.astype(jnp.float32), ref, atol=5e-2, rtol=5e-2), "mismatch (case 4)"

    print("KERNEL_OK")
</pallas_src>

<mosaic_0001>
module attributes {stable_mosaic.version = 11 : i64} {
  func.func @_gem_linear_kernel(%arg0: i32, %arg1: i32, %arg2: memref<2x256x49xf32, #tpu.memory_space<vmem>>, %arg3: memref<256x128xf32, #tpu.memory_space<vmem>>, %arg4: memref<1x128xf32, #tpu.memory_space<vmem>>, %arg5: memref<2x128xf32, #tpu.memory_space<vmem>>, %arg6: memref<2x128xf32, #tpu.memory_space<vmem>>) attributes {dimension_semantics = [#tpu.dimension_semantics<parallel>, #tpu.dimension_semantics<arbitrary>], iteration_bounds = array<i64: 1, 1>, scalar_prefetch = 0 : i64, scratch_operands = 1 : i64, tpu.core_type = #tpu.core_type<tc>, window_params = [{transform_indices = @transform_0, window_bounds = array<i64: 2, 256, 49>}, {pipeline_mode = #tpu.pipeline_mode<synchronous>, transform_indices = @transform_1, window_bounds = array<i64: 256, 128>}, {pipeline_mode = #tpu.pipeline_mode<synchronous>, transform_indices = @transform_2, window_bounds = array<i64: 1, 128>}, {transform_indices = @transform_3, window_bounds = array<i64: 2, 128>}]} {
    %c0_i32 = arith.constant 0 : i32
    %0 = arith.cmpi eq, %arg1, %c0_i32 : i32
    %1 = arith.extui %0 : i1 to i32
    %c0_i32_0 = arith.constant 0 : i32
    %2 = arith.cmpi ne, %1, %c0_i32_0 : i32
    scf.if %2 {
      %cst_14 = arith.constant 0.000000e+00 : f32
      %26 = vector.broadcast %cst_14 : f32 to vector<2x128xf32>
      %c0_15 = arith.constant 0 : index
      %c0_16 = arith.constant 0 : index
      %27 = vector.load %arg6[%c0_15, %c0_16] : memref<2x128xf32, #tpu.memory_space<vmem>>, vector<2x128xf32>
      tpu.vector_store %arg6[%c0_15, %c0_16], %26 {strides = array<i32>} : memref<2x128xf32, #tpu.memory_space<vmem>>, vector<2x128xf32>,
    } else {
    }
    %c0 = arith.constant 0 : index
    %c0_1 = arith.constant 0 : index
    %c0_2 = arith.constant 0 : index
    %3 = vector.load %arg2[%c0, %c0_1, %c0_2] : memref<2x256x49xf32, #tpu.memory_space<vmem>>, vector<2x256x49xf32>
    %cst = arith.constant 9.99999997E-7 : f32
    %4 = vector.broadcast %cst : f32 to vector<2x256x49xf32>
    %5 = arith.maximumf %3, %4 : vector<2x256x49xf32>
    %6 = arith.mulf %5, %5 : vector<2x256x49xf32>
    %7 = arith.mulf %5, %6 : vector<2x256x49xf32>
    %cst_3 = arith.constant dense<0.000000e+00> : vector<2x256xf32>
    %8 = vector.multi_reduction <add>, %7, %cst_3 [2] : vector<2x256x49xf32> to vector<2x256xf32>
    %cst_4 = arith.constant 4.900000e+01 : f32
    %9 = vector.broadcast %cst_4 : f32 to vector<2x256xf32>
    %10 = arith.divf %8, %9 : vector<2x256xf32>
    %11 = math.log %10 : vector<2x256xf32>
    %cst_5 = arith.constant 0.333333343 : f32
    %12 = vector.broadcast %cst_5 : f32 to vector<2x256xf32>
    %13 = arith.mulf %11, %12 : vector<2x256xf32>
    %14 = math.exp %13 : vector<2x256xf32>
    %c256_i32 = arith.constant 256 : i32
    %15 = arith.muli %arg1, %c256_i32 : i32
    %16 = tpu.assume_multiple %15, 256 : i32
    %17 = arith.index_cast %16 : i32 to index
    %c0_6 = arith.constant 0 : index
    %18 = vector.load %arg3[%17, %c0_6] : memref<256x128xf32, #tpu.memory_space<vmem>>, vector<256x128xf32>
    %c0_7 = arith.constant 0 : index
    %c0_8 = arith.constant 0 : index
    %19 = vector.load %arg6[%c0_7, %c0_8] : memref<2x128xf32, #tpu.memory_space<vmem>>, vector<2x128xf32>
    %cst_9 = arith.constant dense<0.000000e+00> : vector<2x128xf32>
    %20 = tpu.matmul %14, %18, %cst_9 {dimension_numbers = #tpu.dot_dimension_numbers<[1], [0], [0], [1], [0, 0, 1, 1], [], []>} : vector<2x256xf32>, vector<256x128xf32>, vector<2x128xf32> -> vector<2x128xf32>
    %21 = arith.addf %19, %20 : vector<2x128xf32>
    %c0_10 = arith.constant 0 : index
    %c0_11 = arith.constant 0 : index
    %22 = vector.load %arg6[%c0_10, %c0_11] : memref<2x128xf32, #tpu.memory_space<vmem>>, vector<2x128xf32>
    tpu.vector_store %arg6[%c0_10, %c0_11], %21 {strides = array<i32>} : memref<2x128xf32, #tpu.memory_space<vmem>>, vector<2x128xf32>,
    %c0_i32_12 = arith.constant 0 : i32
    %23 = arith.cmpi eq, %arg1, %c0_i32_12 : i32
    %24 = arith.extui %23 : i1 to i32
    %c0_i32_13 = arith.constant 0 : i32
    %25 = arith.cmpi ne, %24, %c0_i32_13 : i32
    scf.if %25 {
      %c0_14 = arith.constant 0 : index
      %c0_15 = arith.constant 0 : index
      %26 = vector.load %arg6[%c0_14, %c0_15] : memref<2x128xf32, #tpu.memory_space<vmem>>, vector<2x128xf32>
      %c0_16 = arith.constant 0 : index
      %c0_17 = arith.constant 0 : index
      %27 = vector.load %arg4[%c0_16, %c0_17] : memref<1x128xf32, #tpu.memory_space<vmem>>, vector<1x128xf32>
      %28 = vector.broadcast %27 : vector<1x128xf32> to vector<2x128xf32>
      %29 = arith.addf %26, %28 : vector<2x128xf32>
      %c0_18 = arith.constant 0 : index
      %c0_19 = arith.constant 0 : index
      %30 = vector.load %arg5[%c0_18, %c0_19] : memref<2x128xf32, #tpu.memory_space<vmem>>, vector<2x128xf32>
      tpu.vector_store %arg5[%c0_18, %c0_19], %29 {strides = array<i32>} : memref<2x128xf32, #tpu.memory_space<vmem>>, vector<2x128xf32>,
    } else {
    }
    return
  }
  func.func @transform_0(%arg0: i32, %arg1: i32) -> (i32, i32, i32) {
    %c0_i32 = arith.constant 0 : i32
    %c0_i32_0 = arith.constant 0 : i32
    return %arg0, %arg1, %c0_i32 : i32, i32, i32
  }
  func.func @transform_1(%arg0: i32, %arg1: i32) -> (i32, i32) {
    %c0_i32 = arith.constant 0 : i32
    %c0_i32_0 = arith.constant 0 : i32
    %c0_i32_1 = arith.constant 0 : i32
    return %c0_i32, %c0_i32_0 : i32, i32
  }
  func.func @transform_2(%arg0: i32, %arg1: i32) -> (i32, i32) {
    %c0_i32 = arith.constant 0 : i32
    %c0_i32_0 = arith.constant 0 : i32
    %c0_i32_1 = arith.constant 0 : i32
    return %c0_i32, %c0_i32_0 : i32, i32
  }
  func.func @transform_3(%arg0: i32, %arg1: i32) -> (i32, i32) {
    %c0_i32 = arith.constant 0 : i32
    %c0_i32_0 = arith.constant 0 : i32
    return %arg0, %c0_i32 : i32, i32
  }
}

</mosaic_0001>

<llo_original>
// kernel: tpu_custom_call.1
$region0: #{tpu_custom_call.1}
  #allocation0 [shape = 'u32[]', space=smem, size = 0x4, offset = 0x4, fixed_abs, tag = 'smem constant byte address 0x4 - core index']
  #allocation1 [shape = 'u32[144,128]{1,0:T(1,128)}', space=vmem, size = 0x12000, scoped, tag = 'internal scratch']
  #allocation2 [shape = 'f32[2,128]{1,0:T(2,128)}', space=vmem, size = 0x400, scoped, tag = 'scratch operand']
  %s0 = inlined_call_operand.vmem [shape: f32[2,256,49], index: 0, kind: input, shape index: {}]
  %s1 = inlined_call_operand.vmem [shape: f32[256,128], index: 1, kind: input, shape index: {}]
  %s2 = inlined_call_operand.vmem [shape: f32[1,128], index: 2, kind: input, shape index: {}]
  %s3 = inlined_call_operand.hbm [shape: f32[2,128], index: 3, kind: output, shape index: {}]
  %s4 = sld [smem:[#allocation0]]
  $region30: #{tpu_custom_call.1} parent=0
    _
  %s6 = ssub.s32 1, %s4
  %s7 = scalar_select 0, %s6, %s4
  $region1: #{tpu_custom_call.1} parent=0
    #allocation3 [shape = 'u8[1024]{0}', space=vmem, size = 0x400, scoped, tag = 'output window, operand 0, single buffered']
    #allocation4 [shape = 's32[1]{0}', space=sflag, size = 0x4, scoped, tag = 'scoped memory for tpu_custom_call.1']
    %8 = vsyncpa [#allocation4], 0
    // Predicated region
    $region2: #{tpu_custom_call.1} parent=1 // pred_check
      _
    $region3: #{tpu_custom_call.1} parent=1 // pred_check_branch
      %10 = sbr.rel (0) target = $region5
    $region4: #{tpu_custom_call.1} parent=1 // pred_region
      _
    $region5: #{tpu_custom_call.1} parent=1 // pred_fallthru
      _
    // Predicated region
    $region6: #{tpu_custom_call.1} parent=1 // pred_check
      _
    $region7: #{tpu_custom_call.1} parent=1 // pred_check_branch
      %12 = sbr.rel (0) target = $region9
    $region8: #{tpu_custom_call.1} parent=1 // pred_region
      _
    $region9: #{tpu_custom_call.1} parent=1 // pred_fallthru
      _
    // Predicated region
    $region10: #{tpu_custom_call.1} parent=1 // pred_check
      _
    $region11: #{tpu_custom_call.1} parent=1 // pred_check_branch
      %14 = sbr.rel (0) target = $region13
    $region12: #{tpu_custom_call.1} parent=1 // pred_region
      _
    $region13: #{tpu_custom_call.1} parent=1 // pred_fallthru
      _
    %p15 = scmp.eq.s32.totalorder 0, 0
    // Predicated region
    $region14: #{tpu_custom_call.1} parent=1 // pred_check
      %p16 = pneg %p15
    $region15: #{tpu_custom_call.1} parent=1 // pred_check_branch
      %18 = sbr.rel (%p16) target = $region17
    $region16: #{tpu_custom_call.1} parent=1 // pred_region
      %19 = vst [vmem:[#allocation2] sm:$0x3] 0.0
    $region17: #{tpu_custom_call.1} parent=1 // pred_fallthru
      _
    %v20 = vld [vmem:[%s0] sm:$0xff]
    %v21 = vld [vmem:[%s0 + $0x8] sm:$0xff]
    %v22 = vld [vmem:[%s0 + $0x10] sm:$0xff]
    %v23 = vld [vmem:[%s0 + $0x18] sm:$0xff]
    %v24 = vld [vmem:[%s0 + $0x20] sm:$0xff]
    %v25 = vld [vmem:[%s0 + $0x28] sm:$0xff]
    %v26 = vld [vmem:[%s0 + $0x30] sm:$0xff]
    %v27 = vld [vmem:[%s0 + $0x38] sm:$0xff]
    %v28 = vld [vmem:[%s0 + $0x40] sm:$0xff]
    %v29 = vld [vmem:[%s0 + $0x48] sm:$0xff]
    %v30 = vld [vmem:[%s0 + $0x50] sm:$0xff]
    %v31 = vld [vmem:[%s0 + $0x58] sm:$0xff]
    %v32 = vld [vmem:[%s0 + $0x60] sm:$0xff]
    %v33 = vld [vmem:[%s0 + $0x68] sm:$0xff]
    %v34 = vld [vmem:[%s0 + $0x70] sm:$0xff]
    %v35 = vld [vmem:[%s0 + $0x78] sm:$0xff]
    %v36 = vld [vmem:[%s0 + $0x80] sm:$0xff]
    %v37 = vld [vmem:[%s0 + $0x88] sm:$0xff]
    %v38 = vld [vmem:[%s0 + $0x90] sm:$0xff]
    %v39 = vld [vmem:[%s0 + $0x98] sm:$0xff]
    %v40 = vld [vmem:[%s0 + $0xa0] sm:$0xff]
    %v41 = vld [vmem:[%s0 + $0xa8] sm:$0xff]
    %v42 = vld [vmem:[%s0 + $0xb0] sm:$0xff]
    %v43 = vld [vmem:[%s0 + $0xb8] sm:$0xff]
    %v44 = vld [vmem:[%s0 + $0xc0] sm:$0xff]
    %v45 = vld [vmem:[%s0 + $0xc8] sm:$0xff]
    %v46 = vld [vmem:[%s0 + $0xd0] sm:$0xff]
    %v47 = vld [vmem:[%s0 + $0xd8] sm:$0xff]
    %v48 = vld [vmem:[%s0 + $0xe0] sm:$0xff]
    %v49 = vld [vmem:[%s0 + $0xe8] sm:$0xff]
    %v50 = vld [vmem:[%s0 + $0xf0] sm:$0xff]
    %v51 = vld [vmem:[%s0 + $0xf8] sm:$0xff]
    %v52 = vld [vmem:[%s0 + $0x100] sm:$0xff]
    %v53 = vld [vmem:[%s0 + $0x108] sm:$0xff]
    %v54 = vld [vmem:[%s0 + $0x110] sm:$0xff]
    %v55 = vld [vmem:[%s0 + $0x118] sm:$0xff]
    %v56 = vld [vmem:[%s0 + $0x120] sm:$0xff]
    %v57 = vld [vmem:[%s0 + $0x128] sm:$0xff]
    %v58 = vld [vmem:[%s0 + $0x130] sm:$0xff]
    %v59 = vld [vmem:[%s0 + $0x138] sm:$0xff]
    %v60 = vld [vmem:[%s0 + $0x140] sm:$0xff]
    %v61 = vld [vmem:[%s0 + $0x148] sm:$0xff]
    %v62 = vld [vmem:[%s0 + $0x150] sm:$0xff]
    %v63 = vld [vmem:[%s0 + $0x158] sm:$0xff]
    %v64 = vld [vmem:[%s0 + $0x160] sm:$0xff]
    %v65 = vld [vmem:[%s0 + $0x168] sm:$0xff]
    %v66 = vld [vmem:[%s0 + $0x170] sm:$0xff]
    %v67 = vld [vmem:[%s0 + $0x178] sm:$0xff]
    %v68 = vld [vmem:[%s0 + $0x180] sm:$0xff]
    %v69 = vld [vmem:[%s0 + $0x188] sm:$0xff]
    %v70 = vld [vmem:[%s0 + $0x190] sm:$0xff]
    %v71 = vld [vmem:[%s0 + $0x198] sm:$0xff]
    %v72 = vld [vmem:[%s0 + $0x1a0] sm:$0xff]
    %v73 = vld [vmem:[%s0 + $0x1a8] sm:$0xff]
    %v74 = vld [vmem:[%s0 + $0x1b0] sm:$0xff]
    %v75 = vld [vmem:[%s0 + $0x1b8] sm:$0xff]
    %v76 = vld [vmem:[%s0 + $0x1c0] sm:$0xff]
    %v77 = vld [vmem:[%s0 + $0x1c8] sm:$0xff]
    %v78 = vld [vmem:[%s0 + $0x1d0] sm:$0xff]
    %v79 = vld [vmem:[%s0 + $0x1d8] sm:$0xff]
    %v80 = vld [vmem:[%s0 + $0x1e0] sm:$0xff]
    %v81 = vld [vmem:[%s0 + $0x1e8] sm:$0xff]
    %v82 = vld [vmem:[%s0 + $0x1f0] sm:$0xff]
    %v83 = vld [vmem:[%s0 + $0x1f8] sm:$0xff]
    %v84 = vmax.f32 %v20, 1e-06
    %v85 = vmax.f32 %v21, 1e-06
    %v86 = vmax.f32 %v22, 1e-06
    %v87 = vmax.f32 %v23, 1e-06
    %v88 = vmax.f32 %v24, 1e-06
    %v89 = vmax.f32 %v25, 1e-06
    %v90 = vmax.f32 %v26, 1e-06
    %v91 = vmax.f32 %v27, 1e-06
    %v92 = vmax.f32 %v28, 1e-06
    %v93 = vmax.f32 %v29, 1e-06
    %v94 = vmax.f32 %v30, 1e-06
    %v95 = vmax.f32 %v31, 1e-06
    %v96 = vmax.f32 %v32, 1e-06
    %v97 = vmax.f32 %v33, 1e-06
    %v98 = vmax.f32 %v34, 1e-06
    %v99 = vmax.f32 %v35, 1e-06
    %v100 = vmax.f32 %v36, 1e-06
    %v101 = vmax.f32 %v37, 1e-06
    %v102 = vmax.f32 %v38, 1e-06
    %v103 = vmax.f32 %v39, 1e-06
    %v104 = vmax.f32 %v40, 1e-06
    %v105 = vmax.f32 %v41, 1e-06
    %v106 = vmax.f32 %v42, 1e-06
    %v107 = vmax.f32 %v43, 1e-06
    %v108 = vmax.f32 %v44, 1e-06
    %v109 = vmax.f32 %v45, 1e-06
    %v110 = vmax.f32 %v46, 1e-06
    %v111 = vmax.f32 %v47, 1e-06
    %v112 = vmax.f32 %v48, 1e-06
    %v113 = vmax.f32 %v49, 1e-06
    %v114 = vmax.f32 %v50, 1e-06
    %v115 = vmax.f32 %v51, 1e-06
    %v116 = vmax.f32 %v52, 1e-06
    %v117 = vmax.f32 %v53, 1e-06
    %v118 = vmax.f32 %v54, 1e-06
    %v119 = vmax.f32 %v55, 1e-06
    %v120 = vmax.f32 %v56, 1e-06
    %v121 = vmax.f32 %v57, 1e-06
    %v122 = vmax.f32 %v58, 1e-06
    %v123 = vmax.f32 %v59, 1e-06
    %v124 = vmax.f32 %v60, 1e-06
    %v125 = vmax.f32 %v61, 1e-06
    %v126 = vmax.f32 %v62, 1e-06
    %v127 = vmax.f32 %v63, 1e-06
    %v128 = vmax.f32 %v64, 1e-06
    %v129 = vmax.f32 %v65, 1e-06
    %v130 = vmax.f32 %v66, 1e-06
    %v131 = vmax.f32 %v67, 1e-06
    %v132 = vmax.f32 %v68, 1e-06
    %v133 = vmax.f32 %v69, 1e-06
    %v134 = vmax.f32 %v70, 1e-06
    %v135 = vmax.f32 %v71, 1e-06
    %v136 = vmax.f32 %v72, 1e-06
    %v137 = vmax.f32 %v73, 1e-06
    %v138 = vmax.f32 %v74, 1e-06
    %v139 = vmax.f32 %v75, 1e-06
    %v140 = vmax.f32 %v76, 1e-06
    %v141 = vmax.f32 %v77, 1e-06
    %v142 = vmax.f32 %v78, 1e-06
    %v143 = vmax.f32 %v79, 1e-06
    %v144 = vmax.f32 %v80, 1e-06
    %v145 = vmax.f32 %v81, 1e-06
    %v146 = vmax.f32 %v82, 1e-06
    %v147 = vmax.f32 %v83, 1e-06
    %v148 = vmul.f32 %v84, %v84
    %v149 = vmul.f32 %v85, %v85
    %v150 = vmul.f32 %v86, %v86
    %v151 = vmul.f32 %v87, %v87
    %v152 = vmul.f32 %v88, %v88
    %v153 = vmul.f32 %v89, %v89
    %v154 = vmul.f32 %v90, %v90
    %v155 = vmul.f32 %v91, %v91
    %v156 = vmul.f32 %v92, %v92
    %v157 = vmul.f32 %v93, %v93
    %v158 = vmul.f32 %v94, %v94
    %v159 = vmul.f32 %v95, %v95
    %v160 = vmul.f32 %v96, %v96
    %v161 = vmul.f32 %v97, %v97
    %v162 = vmul.f32 %v98, %v98
    %v163 = vmul.f32 %v99, %v99
    %v164 = vmul.f32 %v100, %v100
    %v165 = vmul.f32 %v101, %v101
    %v166 = vmul.f32 %v102, %v102
    %v167 = vmul.f32 %v103, %v103
    %v168 = vmul.f32 %v104, %v104
    %v169 = vmul.f32 %v105, %v105
    %v170 = vmul.f32 %v106, %v106
    %v171 = vmul.f32 %v107, %v107
    %v172 = vmul.f32 %v108, %v108
    %v173 = vmul.f32 %v109, %v109
    %v174 = vmul.f32 %v110, %v110
    %v175 = vmul.f32 %v111, %v111
    %v176 = vmul.f32 %v112, %v112
    %v177 = vmul.f32 %v113, %v113
    %v178 = vmul.f32 %v114, %v114
    %v179 = vmul.f32 %v115, %v115
    %v180 = vmul.f32 %v116, %v116
    %v181 = vmul.f32 %v117, %v117
    %v182 = vmul.f32 %v118, %v118
    %v183 = vmul.f32 %v119, %v119
    %v184 = vmul.f32 %v120, %v120
    %v185 = vmul.f32 %v121, %v121
    %v186 = vmul.f32 %v122, %v122
    %v187 = vmul.f32 %v123, %v123
    %v188 = vmul.f32 %v124, %v124
    %v189 = vmul.f32 %v125, %v125
    %v190 = vmul.f32 %v126, %v126
    %v191 = vmul.f32 %v127, %v127
    %v192 = vmul.f32 %v128, %v128
    %v193 = vmul.f32 %v129, %v129
    %v194 = vmul.f32 %v130, %v130
    %v195 = vmul.f32 %v131, %v131
    %v196 = vmul.f32 %v132, %v132
    %v197 = vmul.f32 %v133, %v133
    %v198 = vmul.f32 %v134, %v134
    %v199 = vmul.f32 %v135, %v135
    %v200 = vmul.f32 %v136, %v136
    %v201 = vmul.f32 %v137, %v137
    %v202 = vmul.f32 %v138, %v138
    %v203 = vmul.f32 %v139, %v139
    %v204 = vmul.f32 %v140, %v140
    %v205 = vmul.f32 %v141, %v141
    %v206 = vmul.f32 %v142, %v142
    %v207 = vmul.f32 %v143, %v143
    %v208 = vmul.f32 %v144, %v144
    %v209 = vmul.f32 %v145, %v145
    %v210 = vmul.f32 %v146, %v146
    %v211 = vmul.f32 %v147, %v147
    %v212 = vmul.f32 %v84, %v148
    %v213 = vmul.f32 %v85, %v149
    %v214 = vmul.f32 %v86, %v150
    %v215 = vmul.f32 %v87, %v151
    %v216 = vmul.f32 %v88, %v152
    %v217 = vmul.f32 %v89, %v153
    %v218 = vmul.f32 %v90, %v154
    %v219 = vmul.f32 %v91, %v155
    %v220 = vmul.f32 %v92, %v156
    %v221 = vmul.f32 %v93, %v157
    %v222 = vmul.f32 %v94, %v158
    %v223 = vmul.f32 %v95, %v159
    %v224 = vmul.f32 %v96, %v160
    %v225 = vmul.f32 %v97, %v161
    %v226 = vmul.f32 %v98, %v162
    %v227 = vmul.f32 %v99, %v163
    %v228 = vmul.f32 %v100, %v164
    %v229 = vmul.f32 %v101, %v165
    %v230 = vmul.f32 %v102, %v166
    %v231 = vmul.f32 %v103, %v167
    %v232 = vmul.f32 %v104, %v168
    %v233 = vmul.f32 %v105, %v169
    %v234 = vmul.f32 %v106, %v170
    %v235 = vmul.f32 %v107, %v171
    %v236 = vmul.f32 %v108, %v172
    %v237 = vmul.f32 %v109, %v173
    %v238 = vmul.f32 %v110, %v174
    %v239 = vmul.f32 %v111, %v175
    %v240 = vmul.f32 %v112, %v176
    %v241 = vmul.f32 %v113, %v177
    %v242 = vmul.f32 %v114, %v178
    %v243 = vmul.f32 %v115, %v179
    %v244 = vmul.f32 %v116, %v180
    %v245 = vmul.f32 %v117, %v181
    %v246 = vmul.f32 %v118, %v182
    %v247 = vmul.f32 %v119, %v183
    %v248 = vmul.f32 %v120, %v184
    %v249 = vmul.f32 %v121, %v185
    %v250 = vmul.f32 %v122, %v186
    %v251 = vmul.f32 %v123, %v187
    %v252 = vmul.f32 %v124, %v188
    %v253 = vmul.f32 %v125, %v189
    %v254 = vmul.f32 %v126, %v190
    %v255 = vmul.f32 %v127, %v191
    %v256 = vmul.f32 %v128, %v192
    %v257 = vmul.f32 %v129, %v193
    %v258 = vmul.f32 %v130, %v194
    %v259 = vmul.f32 %v131, %v195
    %v260 = vmul.f32 %v132, %v196
    %v261 = vmul.f32 %v133, %v197
    %v262 = vmul.f32 %v134, %v198
    %v263 = vmul.f32 %v135, %v199
    %v264 = vmul.f32 %v136, %v200
    %v265 = vmul.f32 %v137, %v201
    %v266 = vmul.f32 %v138, %v202
    %v267 = vmul.f32 %v139, %v203
    %v268 = vmul.f32 %v140, %v204
    %v269 = vmul.f32 %v141, %v205
    %v270 = vmul.f32 %v142, %v206
    %v271 = vmul.f32 %v143, %v207
    %v272 = vmul.f32 %v144, %v208
    %v273 = vmul.f32 %v145, %v209
    %v274 = vmul.f32 %v146, %v210
    %v275 = vmul.f32 %v147, %v211
    %vm276 = vcmask 400384
    %v277 = vsel %vm276, %v212, 0.0
    %278 = vadd.xlane.f32.xlu0 %v277
    %v279 = vpop.xlane.xlu0 %278
    %v280 = vsel %vm276, %v213, 0.0
    %281 = vadd.xlane.f32.xlu0 %v280
    %v282 = vpop.xlane.xlu0 %281
    %v283 = vsel %vm276, %v214, 0.0
    %284 = vadd.xlane.f32.xlu0 %v283
    %v285 = vpop.xlane.xlu0 %284
    %v286 = vsel %vm276, %v215, 0.0
    %287 = vadd.xlane.f32.xlu0 %v286
    %v288 = vpop.xlane.xlu0 %287
    %v289 = vsel %vm276, %v216, 0.0
    %290 = vadd.xlane.f32.xlu0 %v289
    %v291 = vpop.xlane.xlu0 %290
    %v292 = vsel %vm276, %v217, 0.0
    %293 = vadd.xlane.f32.xlu0 %v292
    %v294 = vpop.xlane.xlu0 %293
    %v295 = vsel %vm276, %v218, 0.0
    %296 = vadd.xlane.f32.xlu0 %v295
    %v297 = vpop.xlane.xlu0 %296
    %v298 = vsel %vm276, %v219, 0.0
    %299 = vadd.xlane.f32.xlu0 %v298
    %v300 = vpop.xlane.xlu0 %299
    %v301 = vsel %vm276, %v220, 0.0
    %302 = vadd.xlane.f32.xlu0 %v301
    %v303 = vpop.xlane.xlu0 %302
    %v304 = vsel %vm276, %v221, 0.0
    %305 = vadd.xlane.f32.xlu0 %v304
    %v306 = vpop.xlane.xlu0 %305
    %v307 = vsel %vm276, %v222, 0.0
    %308 = vadd.xlane.f32.xlu0 %v307
    %v309 = vpop.xlane.xlu0 %308
    %v310 = vsel %vm276, %v223, 0.0
    %311 = vadd.xlane.f32.xlu0 %v310
    %v312 = vpop.xlane.xlu0 %311
    %v313 = vsel %vm276, %v224, 0.0
    %314 = vadd.xlane.f32.xlu0 %v313
    %v315 = vpop.xlane.xlu0 %314
    %v316 = vsel %vm276, %v225, 0.0
    %317 = vadd.xlane.f32.xlu0 %v316
    %v318 = vpop.xlane.xlu0 %317
    %v319 = vsel %vm276, %v226, 0.0
    %320 = vadd.xlane.f32.xlu0 %v319
    %v321 = vpop.xlane.xlu0 %320
    %v322 = vsel %vm276, %v227, 0.0
    %323 = vadd.xlane.f32.xlu0 %v322
    %v324 = vpop.xlane.xlu0 %323
    %v325 = vsel %vm276, %v228, 0.0
    %326 = vadd.xlane.f32.xlu0 %v325
    %v327 = vpop.xlane.xlu0 %326
    %v328 = vsel %vm276, %v229, 0.0
    %329 = vadd.xlane.f32.xlu0 %v328
    %v330 = vpop.xlane.xlu0 %329
    %v331 = vsel %vm276, %v230, 0.0
    %332 = vadd.xlane.f32.xlu0 %v331
    %v333 = vpop.xlane.xlu0 %332
    %v334 = vsel %vm276, %v231, 0.0
    %335 = vadd.xlane.f32.xlu0 %v334
    %v336 = vpop.xlane.xlu0 %335
    %v337 = vsel %vm276, %v232, 0.0
    %338 = vadd.xlane.f32.xlu0 %v337
    %v339 = vpop.xlane.xlu0 %338
    %v340 = vsel %vm276, %v233, 0.0
    %341 = vadd.xlane.f32.xlu0 %v340
    %v342 = vpop.xlane.xlu0 %341
    %v343 = vsel %vm276, %v234, 0.0
    %344 = vadd.xlane.f32.xlu0 %v343
    %v345 = vpop.xlane.xlu0 %344
    %v346 = vsel %vm276, %v235, 0.0
    %347 = vadd.xlane.f32.xlu0 %v346
    %v348 = vpop.xlane.xlu0 %347
    %v349 = vsel %vm276, %v236, 0.0
    %350 = vadd.xlane.f32.xlu0 %v349
    %v351 = vpop.xlane.xlu0 %350
    %v352 = vsel %vm276, %v237, 0.0
    %353 = vadd.xlane.f32.xlu0 %v352
    %v354 = vpop.xlane.xlu0 %353
    %v355 = vsel %vm276, %v238, 0.0
    %356 = vadd.xlane.f32.xlu0 %v355
    %v357 = vpop.xlane.xlu0 %356
    %v358 = vsel %vm276, %v239, 0.0
    %359 = vadd.xlane.f32.xlu0 %v358
    %v360 = vpop.xlane.xlu0 %359
    %v361 = vsel %vm276, %v240, 0.0
    %362 = vadd.xlane.f32.xlu0 %v361
    %v363 = vpop.xlane.xlu0 %362
    %v364 = vsel %vm276, %v241, 0.0
    %365 = vadd.xlane.f32.xlu0 %v364
    %v366 = vpop.xlane.xlu0 %365
    %v367 = vsel %vm276, %v242, 0.0
    %368 = vadd.xlane.f32.xlu0 %v367
    %v369 = vpop.xlane.xlu0 %368
    %v370 = vsel %vm276, %v243, 0.0
    %371 = vadd.xlane.f32.xlu0 %v370
    %v372 = vpop.xlane.xlu0 %371
    %v373 = vsel %vm276, %v244, 0.0
    %374 = vadd.xlane.f32.xlu0 %v373
    %v375 = vpop.xlane.xlu0 %374
    %v376 = vsel %vm276, %v245, 0.0
    %377 = vadd.xlane.f32.xlu0 %v376
    %v378 = vpop.xlane.xlu0 %377
    %v379 = vsel %vm276, %v246, 0.0
    %380 = vadd.xlane.f32.xlu0 %v379
    %v381 = vpop.xlane.xlu0 %380
    %v382 = vsel %vm276, %v247, 0.0
    %383 = vadd.xlane.f32.xlu0 %v382
    %v384 = vpop.xlane.xlu0 %383
    %v385 = vsel %vm276, %v248, 0.0
    %386 = vadd.xlane.f32.xlu0 %v385
    %v387 = vpop.xlane.xlu0 %386
    %v388 = vsel %vm276, %v249, 0.0
    %389 = vadd.xlane.f32.xlu0 %v388
    %v390 = vpop.xlane.xlu0 %389
    %v391 = vsel %vm276, %v250, 0.0
    %392 = vadd.xlane.f32.xlu0 %v391
    %v393 = vpop.xlane.xlu0 %392
    %v394 = vsel %vm276, %v251, 0.0
    %395 = vadd.xlane.f32.xlu0 %v394
    %v396 = vpop.xlane.xlu0 %395
    %v397 = vsel %vm276, %v252, 0.0
    %398 = vadd.xlane.f32.xlu0 %v397
    %v399 = vpop.xlane.xlu0 %398
    %v400 = vsel %vm276, %v253, 0.0
    %401 = vadd.xlane.f32.xlu0 %v400
    %v402 = vpop.xlane.xlu0 %401
    %v403 = vsel %vm276, %v254, 0.0
    %404 = vadd.xlane.f32.xlu0 %v403
    %v405 = vpop.xlane.xlu0 %404
    %v406 = vsel %vm276, %v255, 0.0
    %407 = vadd.xlane.f32.xlu0 %v406
    %v408 = vpop.xlane.xlu0 %407
    %v409 = vsel %vm276, %v256, 0.0
    %410 = vadd.xlane.f32.xlu0 %v409
    %v411 = vpop.xlane.xlu0 %410
    %v412 = vsel %vm276, %v257, 0.0
    %413 = vadd.xlane.f32.xlu0 %v412
    %v414 = vpop.xlane.xlu0 %413
    %v415 = vsel %vm276, %v258, 0.0
    %416 = vadd.xlane.f32.xlu0 %v415
    %v417 = vpop.xlane.xlu0 %416
    %v418 = vsel %vm276, %v259, 0.0
    %419 = vadd.xlane.f32.xlu0 %v418
    %v420 = vpop.xlane.xlu0 %419
    %v421 = vsel %vm276, %v260, 0.0
    %422 = vadd.xlane.f32.xlu0 %v421
    %v423 = vpop.xlane.xlu0 %422
    %v424 = vsel %vm276, %v261, 0.0
    %425 = vadd.xlane.f32.xlu0 %v424
    %v426 = vpop.xlane.xlu0 %425
    %v427 = vsel %vm276, %v262, 0.0
    %428 = vadd.xlane.f32.xlu0 %v427
    %v429 = vpop.xlane.xlu0 %428
    %v430 = vsel %vm276, %v263, 0.0
    %431 = vadd.xlane.f32.xlu0 %v430
    %v432 = vpop.xlane.xlu0 %431
    %v433 = vsel %vm276, %v264, 0.0
    %434 = vadd.xlane.f32.xlu0 %v433
    %v435 = vpop.xlane.xlu0 %434
    %v436 = vsel %vm276, %v265, 0.0
    %437 = vadd.xlane.f32.xlu0 %v436
    %v438 = vpop.xlane.xlu0 %437
    %v439 = vsel %vm276, %v266, 0.0
    %440 = vadd.xlane.f32.xlu0 %v439
    %v441 = vpop.xlane.xlu0 %440
    %v442 = vsel %vm276, %v267, 0.0
    %443 = vadd.xlane.f32.xlu0 %v442
    %v444 = vpop.xlane.xlu0 %443
    %v445 = vsel %vm276, %v268, 0.0
    %446 = vadd.xlane.f32.xlu0 %v445
    %v447 = vpop.xlane.xlu0 %446
    %v448 = vsel %vm276, %v269, 0.0
    %449 = vadd.xlane.f32.xlu0 %v448
    %v450 = vpop.xlane.xlu0 %449
    %v451 = vsel %vm276, %v270, 0.0
    %452 = vadd.xlane.f32.xlu0 %v451
    %v453 = vpop.xlane.xlu0 %452
    %v454 = vsel %vm276, %v271, 0.0
    %455 = vadd.xlane.f32.xlu0 %v454
    %v456 = vpop.xlane.xlu0 %455
    %v457 = vsel %vm276, %v272, 0.0
    %458 = vadd.xlane.f32.xlu0 %v457
    %v459 = vpop.xlane.xlu0 %458
    %v460 = vsel %vm276, %v273, 0.0
    %461 = vadd.xlane.f32.xlu0 %v460
    %v462 = vpop.xlane.xlu0 %461
    %v463 = vsel %vm276, %v274, 0.0
    %464 = vadd.xlane.f32.xlu0 %v463
    %v465 = vpop.xlane.xlu0 %464
    %v466 = vsel %vm276, %v275, 0.0
    %467 = vadd.xlane.f32.xlu0 %v466
    %v468 = vpop.xlane.xlu0 %467
    %v469 = vrcp.pop 49.0
    %v470 = vmul.f32 %v279, %v469
    %v471 = vmul.f32 %v282, %v469
    %v472 = vmul.f32 %v285, %v469
    %v473 = vmul.f32 %v288, %v469
    %v474 = vmul.f32 %v291, %v469
    %v475 = vmul.f32 %v294, %v469
    %v476 = vmul.f32 %v297, %v469
    %v477 = vmul.f32 %v300, %v469
    %v478 = vmul.f32 %v303, %v469
    %v479 = vmul.f32 %v306, %v469
    %v480 = vmul.f32 %v309, %v469
    %v481 = vmul.f32 %v312, %v469
    %v482 = vmul.f32 %v315, %v469
    %v483 = vmul.f32 %v318, %v469
    %v484 = vmul.f32 %v321, %v469
    %v485 = vmul.f32 %v324, %v469
    %v486 = vmul.f32 %v327, %v469
    %v487 = vmul.f32 %v330, %v469
    %v488 = vmul.f32 %v333, %v469
    %v489 = vmul.f32 %v336, %v469
    %v490 = vmul.f32 %v339, %v469
    %v491 = vmul.f32 %v342, %v469
    %v492 = vmul.f32 %v345, %v469
    %v493 = vmul.f32 %v348, %v469
    %v494 = vmul.f32 %v351, %v469
    %v495 = vmul.f32 %v354, %v469
    %v496 = vmul.f32 %v357, %v469
    %v497 = vmul.f32 %v360, %v469
    %v498 = vmul.f32 %v363, %v469
    %v499 = vmul.f32 %v366, %v469
    %v500 = vmul.f32 %v369, %v469
    %v501 = vmul.f32 %v372, %v469
    %v502 = vmul.f32 %v375, %v469
    %v503 = vmul.f32 %v378, %v469
    %v504 = vmul.f32 %v381, %v469
    %v505 = vmul.f32 %v384, %v469
    %v506 = vmul.f32 %v387, %v469
    %v507 = vmul.f32 %v390, %v469
    %v508 = vmul.f32 %v393, %v469
    %v509 = vmul.f32 %v396, %v469
    %v510 = vmul.f32 %v399, %v469
    %v511 = vmul.f32 %v402, %v469
    %v512 = vmul.f32 %v405, %v469
    %v513 = vmul.f32 %v408, %v469
    %v514 = vmul.f32 %v411, %v469
    %v515 = vmul.f32 %v414, %v469
    %v516 = vmul.f32 %v417, %v469
    %v517 = vmul.f32 %v420, %v469
    %v518 = vmul.f32 %v423, %v469
    %v519 = vmul.f32 %v426, %v469
    %v520 = vmul.f32 %v429, %v469
    %v521 = vmul.f32 %v432, %v469
    %v522 = vmul.f32 %v435, %v469
    %v523 = vmul.f32 %v438, %v469
    %v524 = vmul.f32 %v441, %v469
    %v525 = vmul.f32 %v444, %v469
    %v526 = vmul.f32 %v447, %v469
    %v527 = vmul.f32 %v450, %v469
    %v528 = vmul.f32 %v453, %v469
    %v529 = vmul.f32 %v456, %v469
    %v530 = vmul.f32 %v459, %v469
    %v531 = vmul.f32 %v462, %v469
    %v532 = vmul.f32 %v465, %v469
    %v533 = vmul.f32 %v468, %v469
    %v534 = vlog2.pop %v470
    %v535 = vmul.f32 %v534, 0.6931472
    %v536 = vlog2.pop %v471
    %v537 = vmul.f32 %v536, 0.6931472
    %v538 = vlog2.pop %v472
    %v539 = vmul.f32 %v538, 0.6931472
    %v540 = vlog2.pop %v473
    %v541 = vmul.f32 %v540, 0.6931472
    %v542 = vlog2.pop %v474
    %v543 = vmul.f32 %v542, 0.6931472
    %v544 = vlog2.pop %v475
    %v545 = vmul.f32 %v544, 0.6931472
    %v546 = vlog2.pop %v476
    %v547 = vmul.f32 %v546, 0.6931472
    %v548 = vlog2.pop %v477
    %v549 = vmul.f32 %v548, 0.6931472
    %v550 = vlog2.pop %v478
    %v551 = vmul.f32 %v550, 0.6931472
    %v552 = vlog2.pop %v479
    %v553 = vmul.f32 %v552, 0.6931472
    %v554 = vlog2.pop %v480
    %v555 = vmul.f32 %v554, 0.6931472
    %v556 = vlog2.pop %v481
    %v557 = vmul.f32 %v556, 0.6931472
    %v558 = vlog2.pop %v482
    %v559 = vmul.f32 %v558, 0.6931472
    %v560 = vlog2.pop %v483
    %v561 = vmul.f32 %v560, 0.6931472
    %v562 = vlog2.pop %v484
    %v563 = vmul.f32 %v562, 0.6931472
    %v564 = vlog2.pop %v485
    %v565 = vmul.f32 %v564, 0.6931472
    %v566 = vlog2.pop %v486
    %v567 = vmul.f32 %v566, 0.6931472
    %v568 = vlog2.pop %v487
    %v569 = vmul.f32 %v568, 0.6931472
    %v570 = vlog2.pop %v488
    %v571 = vmul.f32 %v570, 0.6931472
    %v572 = vlog2.pop %v489
    %v573 = vmul.f32 %v572, 0.6931472
    %v574 = vlog2.pop %v490
    %v575 = vmul.f32 %v574, 0.6931472
    %v576 = vlog2.pop %v491
    %v577 = vmul.f32 %v576, 0.6931472
    %v578 = vlog2.pop %v492
    %v579 = vmul.f32 %v578, 0.6931472
    %v580 = vlog2.pop %v493
    %v581 = vmul.f32 %v580, 0.6931472
    %v582 = vlog2.pop %v494
    %v583 = vmul.f32 %v582, 0.6931472
    %v584 = vlog2.pop %v495
    %v585 = vmul.f32 %v584, 0.6931472
    %v586 = vlog2.pop %v496
    %v587 = vmul.f32 %v586, 0.6931472
    %v588 = vlog2.pop %v497
    %v589 = vmul.f32 %v588, 0.6931472
    %v590 = vlog2.pop %v498
    %v591 = vmul.f32 %v590, 0.6931472
    %v592 = vlog2.pop %v499
    %v593 = vmul.f32 %v592, 0.6931472
    %v594 = vlog2.pop %v500
    %v595 = vmul.f32 %v594, 0.6931472
    %v596 = vlog2.pop %v501
    %v597 = vmul.f32 %v596, 0.6931472
    %v598 = vlog2.pop %v502
    %v599 = vmul.f32 %v598, 0.6931472
    %v600 = vlog2.pop %v503
    %v601 = vmul.f32 %v600, 0.6931472
    %v602 = vlog2.pop %v504
    %v603 = vmul.f32 %v602, 0.6931472
    %v604 = vlog2.pop %v505
    %v605 = vmul.f32 %v604, 0.6931472
    %v606 = vlog2.pop %v506
    %v607 = vmul.f32 %v606, 0.6931472
    %v608 = vlog2.pop %v507
    %v609 = vmul.f32 %v608, 0.6931472
    %v610 = vlog2.pop %v508
    %v611 = vmul.f32 %v610, 0.6931472
    %v612 = vlog2.pop %v509
    %v613 = vmul.f32 %v612, 0.6931472
    %v614 = vlog2.pop %v510
    %v615 = vmul.f32 %v614, 0.6931472
    %v616 = vlog2.pop %v511
    %v617 = vmul.f32 %v616, 0.6931472
    %v618 = vlog2.pop %v512
    %v619 = vmul.f32 %v618, 0.6931472
    %v620 = vlog2.pop %v513
    %v621 = vmul.f32 %v620, 0.6931472
    %v622 = vlog2.pop %v514
    %v623 = vmul.f32 %v622, 0.6931472
    %v624 = vlog2.pop %v515
    %v625 = vmul.f32 %v624, 0.6931472
    %v626 = vlog2.pop %v516
    %v627 = vmul.f32 %v626, 0.6931472
    %v628 = vlog2.pop %v517
    %v629 = vmul.f32 %v628, 0.6931472
    %v630 = vlog2.pop %v518
    %v631 = vmul.f32 %v630, 0.6931472
    %v632 = vlog2.pop %v519
    %v633 = vmul.f32 %v632, 0.6931472
    %v634 = vlog2.pop %v520
    %v635 = vmul.f32 %v634, 0.6931472
    %v636 = vlog2.pop %v521
    %v637 = vmul.f32 %v636, 0.6931472
    %v638 = vlog2.pop %v522
    %v639 = vmul.f32 %v638, 0.6931472
    %v640 = vlog2.pop %v523
    %v641 = vmul.f32 %v640, 0.6931472
    %v642 = vlog2.pop %v524
    %v643 = vmul.f32 %v642, 0.6931472
    %v644 = vlog2.pop %v525
    %v645 = vmul.f32 %v644, 0.6931472
    %v646 = vlog2.pop %v526
    %v647 = vmul.f32 %v646, 0.6931472
    %v648 = vlog2.pop %v527
    %v649 = vmul.f32 %v648, 0.6931472
    %v650 = vlog2.pop %v528
    %v651 = vmul.f32 %v650, 0.6931472
    %v652 = vlog2.pop %v529
    %v653 = vmul.f32 %v652, 0.6931472
    %v654 = vlog2.pop %v530
    %v655 = vmul.f32 %v654, 0.6931472
    %v656 = vlog2.pop %v531
    %v657 = vmul.f32 %v656, 0.6931472
    %v658 = vlog2.pop %v532
    %v659 = vmul.f32 %v658, 0.6931472
    %v660 = vlog2.pop %v533
    %v661 = vmul.f32 %v660, 0.6931472
    %v662 = vmul.f32 %v535, 0.33333334
    %v663 = vmul.f32 %v537, 0.33333334
    %v664 = vmul.f32 %v539, 0.33333334
    %v665 = vmul.f32 %v541, 0.33333334
    %v666 = vmul.f32 %v543, 0.33333334
    %v667 = vmul.f32 %v545, 0.33333334
    %v668 = vmul.f32 %v547, 0.33333334
    %v669 = vmul.f32 %v549, 0.33333334
    %v670 = vmul.f32 %v551, 0.33333334
    %v671 = vmul.f32 %v553, 0.33333334
    %v672 = vmul.f32 %v555, 0.33333334
    %v673 = vmul.f32 %v557, 0.33333334
    %v674 = vmul.f32 %v559, 0.33333334
    %v675 = vmul.f32 %v561, 0.33333334
    %v676 = vmul.f32 %v563, 0.33333334
    %v677 = vmul.f32 %v565, 0.33333334
    %v678 = vmul.f32 %v567, 0.33333334
    %v679 = vmul.f32 %v569, 0.33333334
    %v680 = vmul.f32 %v571, 0.33333334
    %v681 = vmul.f32 %v573, 0.33333334
    %v682 = vmul.f32 %v575, 0.33333334
    %v683 = vmul.f32 %v577, 0.33333334
    %v684 = vmul.f32 %v579, 0.33333334
    %v685 = vmul.f32 %v581, 0.33333334
    %v686 = vmul.f32 %v583, 0.33333334
    %v687 = vmul.f32 %v585, 0.33333334
    %v688 = vmul.f32 %v587, 0.33333334
    %v689 = vmul.f32 %v589, 0.33333334
    %v690 = vmul.f32 %v591, 0.33333334
    %v691 = vmul.f32 %v593, 0.33333334
    %v692 = vmul.f32 %v595, 0.33333334
    %v693 = vmul.f32 %v597, 0.33333334
    %v694 = vmul.f32 %v599, 0.33333334
    %v695 = vmul.f32 %v601, 0.33333334
    %v696 = vmul.f32 %v603, 0.33333334
    %v697 = vmul.f32 %v605, 0.33333334
    %v698 = vmul.f32 %v607, 0.33333334
    %v699 = vmul.f32 %v609, 0.33333334
    %v700 = vmul.f32 %v611, 0.33333334
    %v701 = vmul.f32 %v613, 0.33333334
    %v702 = vmul.f32 %v615, 0.33333334
    %v703 = vmul.f32 %v617, 0.33333334
    %v704 = vmul.f32 %v619, 0.33333334
    %v705 = vmul.f32 %v621, 0.33333334
    %v706 = vmul.f32 %v623, 0.33333334
    %v707 = vmul.f32 %v625, 0.33333334
    %v708 = vmul.f32 %v627, 0.33333334
    %v709 = vmul.f32 %v629, 0.33333334
    %v710 = vmul.f32 %v631, 0.33333334
    %v711 = vmul.f32 %v633, 0.33333334
    %v712 = vmul.f32 %v635, 0.33333334
    %v713 = vmul.f32 %v637, 0.33333334
    %v714 = vmul.f32 %v639, 0.33333334
    %v715 = vmul.f32 %v641, 0.33333334
    %v716 = vmul.f32 %v643, 0.33333334
    %v717 = vmul.f32 %v645, 0.33333334
    %v718 = vmul.f32 %v647, 0.33333334
    %v719 = vmul.f32 %v649, 0.33333334
    %v720 = vmul.f32 %v651, 0.33333334
    %v721 = vmul.f32 %v653, 0.33333334
    %v722 = vmul.f32 %v655, 0.33333334
    %v723 = vmul.f32 %v657, 0.33333334
    %v724 = vmul.f32 %v659, 0.33333334
    %v725 = vmul.f32 %v661, 0.33333334
    %v726 = vmul.f32 %v662, 1.442695
    %v727 = vpow.pop %v726
    %v728 = vmul.f32 %v663, 1.442695
    %v729 = vpow.pop %v728
    %v730 = vmul.f32 %v664, 1.442695
    %v731 = vpow.pop %v730
    %v732 = vmul.f32 %v665, 1.442695
    %v733 = vpow.pop %v732
    %v734 = vmul.f32 %v666, 1.442695
    %v735 = vpow.pop %v734
    %v736 = vmul.f32 %v667, 1.442695
    %v737 = vpow.pop %v736
    %v738 = vmul.f32 %v668, 1.442695
    %v739 = vpow.pop %v738
    %v740 = vmul.f32 %v669, 1.442695
    %v741 = vpow.pop %v740
    %v742 = vmul.f32 %v670, 1.442695
    %v743 = vpow.pop %v742
    %v744 = vmul.f32 %v671, 1.442695
    %v745 = vpow.pop %v744
    %v746 = vmul.f32 %v672, 1.442695
    %v747 = vpow.pop %v746
    %v748 = vmul.f32 %v673, 1.442695
    %v749 = vpow.pop %v748
    %v750 = vmul.f32 %v674, 1.442695
    %v751 = vpow.pop %v750
    %v752 = vmul.f32 %v675, 1.442695
    %v753 = vpow.pop %v752
    %v754 = vmul.f32 %v676, 1.442695
    %v755 = vpow.pop %v754
    %v756 = vmul.f32 %v677, 1.442695
    %v757 = vpow.pop %v756
    %v758 = vmul.f32 %v678, 1.442695
    %v759 = vpow.pop %v758
    %v760 = vmul.f32 %v679, 1.442695
    %v761 = vpow.pop %v760
    %v762 = vmul.f32 %v680, 1.442695
    %v763 = vpow.pop %v762
    %v764 = vmul.f32 %v681, 1.442695
    %v765 = vpow.pop %v764
    %v766 = vmul.f32 %v682, 1.442695
    %v767 = vpow.pop %v766
    %v768 = vmul.f32 %v683, 1.442695
    %v769 = vpow.pop %v768
    %v770 = vmul.f32 %v684, 1.442695
    %v771 = vpow.pop %v770
    %v772 = vmul.f32 %v685, 1.442695
    %v773 = vpow.pop %v772
    %v774 = vmul.f32 %v686, 1.442695
    %v775 = vpow.pop %v774
    %v776 = vmul.f32 %v687, 1.442695
    %v777 = vpow.pop %v776
    %v778 = vmul.f32 %v688, 1.442695
    %v779 = vpow.pop %v778
    %v780 = vmul.f32 %v689, 1.442695
    %v781 = vpow.pop %v780
    %v782 = vmul.f32 %v690, 1.442695
    %v783 = vpow.pop %v782
    %v784 = vmul.f32 %v691, 1.442695
    %v785 = vpow.pop %v784
    %v786 = vmul.f32 %v692, 1.442695
    %v787 = vpow.pop %v786
    %v788 = vmul.f32 %v693, 1.442695
    %v789 = vpow.pop %v788
    %v790 = vmul.f32 %v694, 1.442695
    %v791 = vpow.pop %v790
    %v792 = vmul.f32 %v695, 1.442695
    %v793 = vpow.pop %v792
    %v794 = vmul.f32 %v696, 1.442695
    %v795 = vpow.pop %v794
    %v796 = vmul.f32 %v697, 1.442695
    %v797 = vpow.pop %v796
    %v798 = vmul.f32 %v698, 1.442695
    %v799 = vpow.pop %v798
    %v800 = vmul.f32 %v699, 1.442695
    %v801 = vpow.pop %v800
    %v802 = vmul.f32 %v700, 1.442695
    %v803 = vpow.pop %v802
    %v804 = vmul.f32 %v701, 1.442695
    %v805 = vpow.pop %v804
    %v806 = vmul.f32 %v702, 1.442695
    %v807 = vpow.pop %v806
    %v808 = vmul.f32 %v703, 1.442695
    %v809 = vpow.pop %v808
    %v810 = vmul.f32 %v704, 1.442695
    %v811 = vpow.pop %v810
    %v812 = vmul.f32 %v705, 1.442695
    %v813 = vpow.pop %v812
    %v814 = vmul.f32 %v706, 1.442695
    %v815 = vpow.pop %v814
    %v816 = vmul.f32 %v707, 1.442695
    %v817 = vpow.pop %v816
    %v818 = vmul.f32 %v708, 1.442695
    %v819 = vpow.pop %v818
    %v820 = vmul.f32 %v709, 1.442695
    %v821 = vpow.pop %v820
    %v822 = vmul.f32 %v710, 1.442695
    %v823 = vpow.pop %v822
    %v824 = vmul.f32 %v711, 1.442695
    %v825 = vpow.pop %v824
    %v826 = vmul.f32 %v712, 1.442695
    %v827 = vpow.pop %v826
    %v828 = vmul.f32 %v713, 1.442695
    %v829 = vpow.pop %v828
    %v830 = vmul.f32 %v714, 1.442695
    %v831 = vpow.pop %v830
    %v832 = vmul.f32 %v715, 1.442695
    %v833 = vpow.pop %v832
    %v834 = vmul.f32 %v716, 1.442695
    %v835 = vpow.pop %v834
    %v836 = vmul.f32 %v717, 1.442695
    %v837 = vpow.pop %v836
    %v838 = vmul.f32 %v718, 1.442695
    %v839 = vpow.pop %v838
    %v840 = vmul.f32 %v719, 1.442695
    %v841 = vpow.pop %v840
    %v842 = vmul.f32 %v720, 1.442695
    %v843 = vpow.pop %v842
    %v844 = vmul.f32 %v721, 1.442695
    %v845 = vpow.pop %v844
    %v846 = vmul.f32 %v722, 1.442695
    %v847 = vpow.pop %v846
    %v848 = vmul.f32 %v723, 1.442695
    %v849 = vpow.pop %v848
    %v850 = vmul.f32 %v724, 1.442695
    %v851 = vpow.pop %v850
    %v852 = vmul.f32 %v725, 1.442695
    %v853 = vpow.pop %v852
    %s854 = smul.u32 0, 256
    %s855 = scalar_lea.vmem %s1, %s854
    %v856 = vld [vmem:[%s855] sm:$0xff]
    %v857 = vld [vmem:[%s855 + $0x8] sm:$0xff]
    %v858 = vld [vmem:[%s855 + $0x10] sm:$0xff]
    %v859 = vld [vmem:[%s855 + $0x18] sm:$0xff]
    %v860 = vld [vmem:[%s855 + $0x20] sm:$0xff]
    %v861 = vld [vmem:[%s855 + $0x28] sm:$0xff]
    %v862 = vld [vmem:[%s855 + $0x30] sm:$0xff]
    %v863 = vld [vmem:[%s855 + $0x38] sm:$0xff]
    %v864 = vld [vmem:[%s855 + $0x40] sm:$0xff]
    %v865 = vld [vmem:[%s855 + $0x48] sm:$0xff]
    %v866 = vld [vmem:[%s855 + $0x50] sm:$0xff]
    %v867 = vld [vmem:[%s855 + $0x58] sm:$0xff]
    %v868 = vld [vmem:[%s855 + $0x60] sm:$0xff]
    %v869 = vld [vmem:[%s855 + $0x68] sm:$0xff]
    %v870 = vld [vmem:[%s855 + $0x70] sm:$0xff]
    %v871 = vld [vmem:[%s855 + $0x78] sm:$0xff]
    %v872 = vld [vmem:[%s855 + $0x80] sm:$0xff]
    %v873 = vld [vmem:[%s855 + $0x88] sm:$0xff]
    %v874 = vld [vmem:[%s855 + $0x90] sm:$0xff]
    %v875 = vld [vmem:[%s855 + $0x98] sm:$0xff]
    %v876 = vld [vmem:[%s855 + $0xa0] sm:$0xff]
    %v877 = vld [vmem:[%s855 + $0xa8] sm:$0xff]
    %v878 = vld [vmem:[%s855 + $0xb0] sm:$0xff]
    %v879 = vld [vmem:[%s855 + $0xb8] sm:$0xff]
    %v880 = vld [vmem:[%s855 + $0xc0] sm:$0xff]
    %v881 = vld [vmem:[%s855 + $0xc8] sm:$0xff]
    %v882 = vld [vmem:[%s855 + $0xd0] sm:$0xff]
    %v883 = vld [vmem:[%s855 + $0xd8] sm:$0xff]
    %v884 = vld [vmem:[%s855 + $0xe0] sm:$0xff]
    %v885 = vld [vmem:[%s855 + $0xe8] sm:$0xff]
    %v886 = vld [vmem:[%s855 + $0xf0] sm:$0xff]
    %v887 = vld [vmem:[%s855 + $0xf8] sm:$0xff]
    %v888 = vld [vmem:[#allocation2] sm:$0x3]
    %v953 = vlaneseq
    %v954 = vand.u32 %v953, 127
    %v955 = vlaneseq
    %v956 = vshrl.u32 %v955, 7
    %v957 = vsub.s32 %v954, %v956
    %v958 = vrot.slane %v727, %v957
    %v959 = vadd.s32 %v954, 4294967288
    %v960 = vlaneseq
    %v961 = vshrl.u32 %v960, 7
    %v962 = vsub.s32 %v959, %v961
    %v963 = vrot.slane %v729, %v962
    %vm964 = vcmask 130112
    %v965 = vsel %vm964, %v963, %v958
    %v966 = vadd.s32 %v954, 4294967280
    %v967 = vlaneseq
    %v968 = vshrl.u32 %v967, 7
    %v969 = vsub.s32 %v966, %v968
    %v970 = vrot.slane %v731, %v969
    %vm971 = vcmask 195712
    %v972 = vsel %vm971, %v970, %v965
    %v973 = vadd.s32 %v954, 4294967272
    %v974 = vlaneseq
    %v975 = vshrl.u32 %v974, 7
    %v976 = vsub.s32 %v973, %v975
    %v977 = vrot.slane %v733, %v976
    %vm978 = vcmask 261312
    %v979 = vsel %vm978, %v977, %v972
    %v980 = vadd.s32 %v954, 4294967264
    %v981 = vlaneseq
    %v982 = vshrl.u32 %v981, 7
    %v983 = vsub.s32 %v980, %v982
    %v984 = vrot.slane %v735, %v983
    %vm985 = vcmask 326912
    %v986 = vsel %vm985, %v984, %v979
    %v987 = vadd.s32 %v954, 4294967256
    %v988 = vlaneseq
    %v989 = vshrl.u32 %v988, 7
    %v990 = vsub.s32 %v987, %v989
    %v991 = vrot.slane %v737, %v990
    %vm992 = vcmask 392512
    %v993 = vsel %vm992, %v991, %v986
    %v994 = vadd.s32 %v954, 4294967248
    %v995 = vlaneseq
    %v996 = vshrl.u32 %v995, 7
    %v997 = vsub.s32 %v994, %v996
    %v998 = vrot.slane %v739, %v997
    %vm999 = vcmask 458112
    %v1000 = vsel %vm999, %v998, %v993
    %v1001 = vadd.s32 %v954, 4294967240
    %v1002 = vlaneseq
    %v1003 = vshrl.u32 %v1002, 7
    %v1004 = vsub.s32 %v1001, %v1003
    %v1005 = vrot.slane %v741, %v1004
    %vm1006 = vcmask 523712
    %v1007 = vsel %vm1006, %v1005, %v1000
    %v1008 = vadd.s32 %v954, 4294967232
    %v1009 = vlaneseq
    %v1010 = vshrl.u32 %v1009, 7
    %v1011 = vsub.s32 %v1008, %v1010
    %v1012 = vrot.slane %v743, %v1011
    %vm1013 = vcmask 589312
    %v1014 = vsel %vm1013, %v1012, %v1007
    %v1015 = vadd.s32 %v954, 4294967224
    %v1016 = vlaneseq
    %v1017 = vshrl.u32 %v1016, 7
    %v1018 = vsub.s32 %v1015, %v1017
    %v1019 = vrot.slane %v745, %v1018
    %vm1020 = vcmask 654912
    %v1021 = vsel %vm1020, %v1019, %v1014
    %v1022 = vadd.s32 %v954, 4294967216
    %v1023 = vlaneseq
    %v1024 = vshrl.u32 %v1023, 7
    %v1025 = vsub.s32 %v1022, %v1024
    %v1026 = vrot.slane %v747, %v1025
    %vm1027 = vcmask 720512
    %v1028 = vsel %vm1027, %v1026, %v1021
    %v1029 = vadd.s32 %v954, 4294967208
    %v1030 = vlaneseq
    %v1031 = vshrl.u32 %v1030, 7
    %v1032 = vsub.s32 %v1029, %v1031
    %v1033 = vrot.slane %v749, %v1032
    %vm1034 = vcmask 786112
    %v1035 = vsel %vm1034, %v1033, %v1028
    %v1036 = vadd.s32 %v954, 4294967200
    %v1037 = vlaneseq
    %v1038 = vshrl.u32 %v1037, 7
    %v1039 = vsub.s32 %v1036, %v1038
    %v1040 = vrot.slane %v751, %v1039
    %vm1041 = vcmask 851712
    %v1042 = vsel %vm1041, %v1040, %v1035
    %v1043 = vadd.s32 %v954, 4294967192
    %v1044 = vlaneseq
    %v1045 = vshrl.u32 %v1044, 7
    %v1046 = vsub.s32 %v1043, %v1045
    %v1047 = vrot.slane %v753, %v1046
    %vm1048 = vcmask 917312
    %v1049 = vsel %vm1048, %v1047, %v1042
    %v1050 = vadd.s32 %v954, 4294967184
    %v1051 = vlaneseq
    %v1052 = vshrl.u32 %v1051, 7
    %v1053 = vsub.s32 %v1050, %v1052
    %v1054 = vrot.slane %v755, %v1053
    %vm1055 = vcmask 982912
    %v1056 = vsel %vm1055, %v1054, %v1049
    %v1057 = vadd.s32 %v954, 4294967176
    %v1058 = vlaneseq
    %v1059 = vshrl.u32 %v1058, 7
    %v1060 = vsub.s32 %v1057, %v1059
    %v1061 = vrot.slane %v757, %v1060
    %vm1062 = vcmask 1048512
    %v1063 = vsel %vm1062, %v1061, %v1056
    %v1064 = vlaneseq
    %v1065 = vshrl.u32 %v1064, 7
    %v1066 = vsub.s32 %v954, %v1065
    %v1067 = vrot.slane %v759, %v1066
    %v1068 = vlaneseq
    %v1069 = vshrl.u32 %v1068, 7
    %v1070 = vsub.s32 %v959, %v1069
    %v1071 = vrot.slane %v761, %v1070
    %v1072 = vsel %vm964, %v1071, %v1067
    %v1073 = vlaneseq
    %v1074 = vshrl.u32 %v1073, 7
    %v1075 = vsub.s32 %v966, %v1074
    %v1076 = vrot.slane %v763, %v1075
    %v1077 = vsel %vm971, %v1076, %v1072
    %v1078 = vlaneseq
    %v1079 = vshrl.u32 %v1078, 7
    %v1080 = vsub.s32 %v973, %v1079
    %v1081 = vrot.slane %v765, %v1080
    %v1082 = vsel %vm978, %v1081, %v1077
    %v1083 = vlaneseq
    %v1084 = vshrl.u32 %v1083, 7
    %v1085 = vsub.s32 %v980, %v1084
    %v1086 = vrot.slane %v767, %v1085
    %v1087 = vsel %vm985, %v1086, %v1082
    %v1088 = vlaneseq
    %v1089 = vshrl.u32 %v1088, 7
    %v1090 = vsub.s32 %v987, %v1089
    %v1091 = vrot.slane %v769, %v1090
    %v1092 = vsel %vm992, %v1091, %v1087
    %v1093 = vlaneseq
    %v1094 = vshrl.u32 %v1093, 7
    %v1095 = vsub.s32 %v994, %v1094
    %v1096 = vrot.slane %v771, %v1095
    %v1097 = vsel %vm999, %v1096, %v1092
    %v1098 = vlaneseq
    %v1099 = vshrl.u32 %v1098, 7
    %v1100 = vsub.s32 %v1001, %v1099
    %v1101 = vrot.slane %v773, %v1100
    %v1102 = vsel %vm1006, %v1101, %v1097
    %v1103 = vlaneseq
    %v1104 = vshrl.u32 %v1103, 7
    %v1105 = vsub.s32 %v1008, %v1104
    %v1106 = vrot.slane %v775, %v1105
    %v1107 = vsel %vm1013, %v1106, %v1102
    %v1108 = vlaneseq
    %v1109 = vshrl.u32 %v1108, 7
    %v1110 = vsub.s32 %v1015, %v1109
    %v1111 = vrot.slane %v777, %v1110
    %v1112 = vsel %vm1020, %v1111, %v1107
    %v1113 = vlaneseq
    %v1114 = vshrl.u32 %v1113, 7
    %v1115 = vsub.s32 %v1022, %v1114
    %v1116 = vrot.slane %v779, %v1115
    %v1117 = vsel %vm1027, %v1116, %v1112
    %v1118 = vlaneseq
    %v1119 = vshrl.u32 %v1118, 7
    %v1120 = vsub.s32 %v1029, %v1119
    %v1121 = vrot.slane %v781, %v1120
    %v1122 = vsel %vm1034, %v1121, %v1117
    %v1123 = vlaneseq
    %v1124 = vshrl.u32 %v1123, 7
    %v1125 = vsub.s32 %v1036, %v1124
    %v1126 = vrot.slane %v783, %v1125
    %v1127 = vsel %vm1041, %v1126, %v1122
    %v1128 = vlaneseq
    %v1129 = vshrl.u32 %v1128, 7
    %v1130 = vsub.s32 %v1043, %v1129
    %v1131 = vrot.slane %v785, %v1130
    %v1132 = vsel %vm1048, %v1131, %v1127
    %v1133 = vlaneseq
    %v1134 = vshrl.u32 %v1133, 7
    %v1135 = vsub.s32 %v1050, %v1134
    %v1136 = vrot.slane %v787, %v1135
    %v1137 = vsel %vm1055, %v1136, %v1132
    %v1138 = vlaneseq
    %v1139 = vshrl.u32 %v1138, 7
    %v1140 = vsub.s32 %v1057, %v1139
    %v1141 = vrot.slane %v789, %v1140
    %v1142 = vsel %vm1062, %v1141, %v1137
    %v1143 = vlaneseq
    %v1144 = vshrl.u32 %v1143, 7
    %v1145 = vsub.s32 %v954, %v1144
    %v1146 = vrot.slane %v791, %v1145
    %v1147 = vlaneseq
    %v1148 = vshrl.u32 %v1147, 7
    %v1149 = vsub.s32 %v959, %v1148
    %v1150 = vrot.slane %v793, %v1149
    %v1151 = vsel %vm964, %v1150, %v1146
    %v1152 = vlaneseq
    %v1153 = vshrl.u32 %v1152, 7
    %v1154 = vsub.s32 %v966, %v1153
    %v1155 = vrot.slane %v795, %v1154
    %v1156 = vsel %vm971, %v1155, %v1151
    %v1157 = vlaneseq
    %v1158 = vshrl.u32 %v1157, 7
    %v1159 = vsub.s32 %v973, %v1158
    %v1160 = vrot.slane %v797, %v1159
    %v1161 = vsel %vm978, %v1160, %v1156
    %v1162 = vlaneseq
    %v1163 = vshrl.u32 %v1162, 7
    %v1164 = vsub.s32 %v980, %v1163
    %v1165 = vrot.slane %v799, %v1164
    %v1166 = vsel %vm985, %v1165, %v1161
    %v1167 = vlaneseq
    %v1168 = vshrl.u32 %v1167, 7
    %v1169 = vsub.s32 %v987, %v1168
    %v1170 = vrot.slane %v801, %v1169
    %v1171 = vsel %vm992, %v1170, %v1166
    %v1172 = vlaneseq
    %v1173 = vshrl.u32 %v1172, 7
    %v1174 = vsub.s32 %v994, %v1173
    %v1175 = vrot.slane %v803, %v1174
    %v1176 = vsel %vm999, %v1175, %v1171
    %v1177 = vlaneseq
    %v1178 = vshrl.u32 %v1177, 7
    %v1179 = vsub.s32 %v1001, %v1178
    %v1180 = vrot.slane %v805, %v1179
    %v1181 = vsel %vm1006, %v1180, %v1176
    %v1182 = vlaneseq
    %v1183 = vshrl.u32 %v1182, 7
    %v1184 = vsub.s32 %v1008, %v1183
    %v1185 = vrot.slane %v807, %v1184
    %v1186 = vsel %vm1013, %v1185, %v1181
    %v1187 = vlaneseq
    %v1188 = vshrl.u32 %v1187, 7
    %v1189 = vsub.s32 %v1015, %v1188
    %v1190 = vrot.slane %v809, %v1189
    %v1191 = vsel %vm1020, %v1190, %v1186
    %v1192 = vlaneseq
    %v1193 = vshrl.u32 %v1192, 7
    %v1194 = vsub.s32 %v1022, %v1193
    %v1195 = vrot.slane %v811, %v1194
    %v1196 = vsel %vm1027, %v1195, %v1191
    %v1197 = vlaneseq
    %v1198 = vshrl.u32 %v1197, 7
    %v1199 = vsub.s32 %v1029, %v1198
    %v1200 = vrot.slane %v813, %v1199
    %v1201 = vsel %vm1034, %v1200, %v1196
    %v1202 = vlaneseq
    %v1203 = vshrl.u32 %v1202, 7
    %v1204 = vsub.s32 %v1036, %v1203
    %v1205 = vrot.slane %v815, %v1204
    %v1206 = vsel %vm1041, %v1205, %v1201
    %v1207 = vlaneseq
    %v1208 = vshrl.u32 %v1207, 7
    %v1209 = vsub.s32 %v1043, %v1208
    %v1210 = vrot.slane %v817, %v1209
    %v1211 = vsel %vm1048, %v1210, %v1206
    %v1212 = vlaneseq
    %v1213 = vshrl.u32 %v1212, 7
    %v1214 = vsub.s32 %v1050, %v1213
    %v1215 = vrot.slane %v819, %v1214
    %v1216 = vsel %vm1055, %v1215, %v1211
    %v1217 = vlaneseq
    %v1218 = vshrl.u32 %v1217, 7
    %v1219 = vsub.s32 %v1057, %v1218
    %v1220 = vrot.slane %v821, %v1219
    %v1221 = vsel %vm1062, %v1220, %v1216
    %v1222 = vlaneseq
    %v1223 = vshrl.u32 %v1222, 7
    %v1224 = vsub.s32 %v954, %v1223
    %v1225 = vrot.slane %v823, %v1224
    %v1226 = vlaneseq
    %v1227 = vshrl.u32 %v1226, 7
    %v1228 = vsub.s32 %v959, %v1227
    %v1229 = vrot.slane %v825, %v1228
    %v1230 = vsel %vm964, %v1229, %v1225
    %v1231 = vlaneseq
    %v1232 = vshrl.u32 %v1231, 7
    %v1233 = vsub.s32 %v966, %v1232
    %v1234 = vrot.slane %v827, %v1233
    %v1235 = vsel %vm971, %v1234, %v1230
    %v1236 = vlaneseq
    %v1237 = vshrl.u32 %v1236, 7
    %v1238 = vsub.s32 %v973, %v1237
    %v1239 = vrot.slane %v829, %v1238
    %v1240 = vsel %vm978, %v1239, %v1235
    %v1241 = vlaneseq
    %v1242 = vshrl.u32 %v1241, 7
    %v1243 = vsub.s32 %v980, %v1242
    %v1244 = vrot.slane %v831, %v1243
    %v1245 = vsel %vm985, %v1244, %v1240
    %v1246 = vlaneseq
    %v1247 = vshrl.u32 %v1246, 7
    %v1248 = vsub.s32 %v987, %v1247
    %v1249 = vrot.slane %v833, %v1248
    %v1250 = vsel %vm992, %v1249, %v1245
    %v1251 = vlaneseq
    %v1252 = vshrl.u32 %v1251, 7
    %v1253 = vsub.s32 %v994, %v1252
    %v1254 = vrot.slane %v835, %v1253
    %v1255 = vsel %vm999, %v1254, %v1250
    %v1256 = vlaneseq
    %v1257 = vshrl.u32 %v1256, 7
    %v1258 = vsub.s32 %v1001, %v1257
    %v1259 = vrot.slane %v837, %v1258
    %v1260 = vsel %vm1006, %v1259, %v1255
    %v1261 = vlaneseq
    %v1262 = vshrl.u32 %v1261, 7
    %v1263 = vsub.s32 %v1008, %v1262
    %v1264 = vrot.slane %v839, %v1263
    %v1265 = vsel %vm1013, %v1264, %v1260
    %v1266 = vlaneseq
    %v1267 = vshrl.u32 %v1266, 7
    %v1268 = vsub.s32 %v1015, %v1267
    %v1269 = vrot.slane %v841, %v1268
    %v1270 = vsel %vm1020, %v1269, %v1265
    %v1271 = vlaneseq
    %v1272 = vshrl.u32 %v1271, 7
    %v1273 = vsub.s32 %v1022, %v1272
    %v1274 = vrot.slane %v843, %v1273
    %v1275 = vsel %vm1027, %v1274, %v1270
    %v1276 = vlaneseq
    %v1277 = vshrl.u32 %v1276, 7
    %v1278 = vsub.s32 %v1029, %v1277
    %v1279 = vrot.slane %v845, %v1278
    %v1280 = vsel %vm1034, %v1279, %v1275
    %v1281 = vlaneseq
    %v1282 = vshrl.u32 %v1281, 7
    %v1283 = vsub.s32 %v1036, %v1282
    %v1284 = vrot.slane %v847, %v1283
    %v1285 = vsel %vm1041, %v1284, %v1280
    %v1286 = vlaneseq
    %v1287 = vshrl.u32 %v1286, 7
    %v1288 = vsub.s32 %v1043, %v1287
    %v1289 = vrot.slane %v849, %v1288
    %v1290 = vsel %vm1048, %v1289, %v1285
    %v1291 = vlaneseq
    %v1292 = vshrl.u32 %v1291, 7
    %v1293 = vsub.s32 %v1050, %v1292
    %v1294 = vrot.slane %v851, %v1293
    %v1295 = vsel %vm1055, %v1294, %v1290
    %v1296 = vlaneseq
    %v1297 = vshrl.u32 %v1296, 7
    %v1298 = vsub.s32 %v1057, %v1297
    %v1299 = vrot.slane %v853, %v1298
    %v1300 = vsel %vm1062, %v1299, %v1295
    %vm1301 = vcmask 1041409
    %v1302 = vsel %vm1301, %v1221, %v1063
    %v1303 = vsel %vm1301, %v1300, %v1142
    %1306 = vmatprep.subr.mxu0 0.0
    %1307 = vmatpush1.msra.mxu0 %v856
    %1308 = vmatprep.subr.mxu0 0.0
    %1309 = vmatpush1.msra.mxu0 %v857
    %1310 = vmatprep.subr.mxu0 0.0
    %1311 = vmatpush1.msra.mxu0 %v858
    %1312 = vmatprep.subr.mxu0 0.0
    %1313 = vmatpush1.msra.mxu0 %v859
    %1314 = vmatprep.subr.mxu0 0.0
    %1315 = vmatpush1.msra.mxu0 %v860
    %1316 = vmatprep.subr.mxu0 0.0
    %1317 = vmatpush1.msra.mxu0 %v861
    %1318 = vmatprep.subr.mxu0 0.0
    %1319 = vmatpush1.msra.mxu0 %v862
    %1320 = vmatprep.subr.mxu0 0.0
    %1321 = vmatpush1.msra.mxu0 %v863
    %1322 = vmatprep.subr.mxu0 0.0
    %1323 = vmatpush1.msra.mxu0 %v864
    %1324 = vmatprep.subr.mxu0 0.0
    %1325 = vmatpush1.msra.mxu0 %v865
    %1326 = vmatprep.subr.mxu0 0.0
    %1327 = vmatpush1.msra.mxu0 %v866
    %1328 = vmatprep.subr.mxu0 0.0
    %1329 = vmatpush1.msra.mxu0 %v867
    %1330 = vmatprep.subr.mxu0 0.0
    %1331 = vmatpush1.msra.mxu0 %v868
    %1332 = vmatprep.subr.mxu0 0.0
    %1333 = vmatpush1.msra.mxu0 %v869
    %1334 = vmatprep.subr.mxu0 0.0
    %1335 = vmatpush1.msra.mxu0 %v870
    %1336 = vmatprep.subr.mxu0 0.0
    %1337 = vmatpush1.msra.mxu0 %v871
    %1338 = vmatprep.subr.mxu0 0.0
    %1339 = vmatpush1.msra.mxu0 %v872
    %1340 = vmatprep.subr.mxu0 0.0
    %1341 = vmatpush1.msra.mxu0 %v873
    %1342 = vmatprep.subr.mxu0 0.0
    %1343 = vmatpush1.msra.mxu0 %v874
    %1344 = vmatprep.subr.mxu0 0.0
    %1345 = vmatpush1.msra.mxu0 %v875
    %1346 = vmatprep.subr.mxu0 0.0
    %1347 = vmatpush1.msra.mxu0 %v876
    %1348 = vmatprep.subr.mxu0 0.0
    %1349 = vmatpush1.msra.mxu0 %v877
    %1350 = vmatprep.subr.mxu0 0.0
    %1351 = vmatpush1.msra.mxu0 %v878
    %1352 = vmatprep.subr.mxu0 0.0
    %1353 = vmatpush1.msra.mxu0 %v879
    %1354 = vmatprep.subr.mxu0 0.0
    %1355 = vmatpush1.msra.mxu0 %v880
    %1356 = vmatprep.subr.mxu0 0.0
    %1357 = vmatpush1.msra.mxu0 %v881
    %1358 = vmatprep.subr.mxu0 0.0
    %1359 = vmatpush1.msra.mxu0 %v882
    %1360 = vmatprep.subr.mxu0 0.0
    %1361 = vmatpush1.msra.mxu0 %v883
    %1362 = vmatprep.subr.mxu0 0.0
    %1363 = vmatpush1.msra.mxu0 %v884
    %1364 = vmatprep.subr.mxu0 0.0
    %1365 = vmatpush1.msra.mxu0 %v885
    %1366 = vmatprep.subr.mxu0 0.0
    %1367 = vmatpush1.msra.mxu0 %v886
    %1368 = vmatprep.subr.mxu0 0.0
    %1369 = vmatpush1.msra.mxu0 %v887
    %1370 = vmatprep.mubr.f32.mxu0 %v1303
    %1371 = vmatmul.mubr.f32.gmra.mrb[0].mxu0 %v1302
    %v1372 = vpop.f32.mrb[0].mxu0
    %v1373 = vadd.f32 0.0, %v1372
    %v1374 = vpop.f32.mrb[0].mxu0
    %1375 = vdwg.mxu0
    %v1376 = vadd.f32 %v888, %v1373
    %1377 = vst [vmem:[#allocation2] sm:$0x3] %v1376
    // Predicated region
    $region18: #{tpu_custom_call.1} parent=1 // pred_check
      %p1378 = pneg %p15
    $region19: #{tpu_custom_call.1} parent=1 // pred_check_branch
      %1380 = sbr.rel (%p1378) target = $region21
    $region20: #{tpu_custom_call.1} parent=1 // pred_region
      %v1381 = vld [vmem:[#allocation2] sm:$0x3]
      %v1382 = vld [vmem:[%s2] sm:$0x1]
      %v1384 = vlaneseq
      %v1385 = vshrl.u32 %v1384, 7
      %v1386 = vsub.s32 0, %v1385
      %v1387 = vrot.slane %v1382, %v1386
      %v1389 = vadd.f32 %v1381, %v1387
      %1390 = vst [vmem:[#allocation3] sm:$0x3] %v1389
    $region21: #{tpu_custom_call.1} parent=1 // pred_fallthru
      _
    // Predicated region
    $region22: #{tpu_custom_call.1} parent=1 // pred_check
      _
    $region23: #{tpu_custom_call.1} parent=1 // pred_check_branch
      %1392 = sbr.rel (0) target = $region25
    $region24: #{tpu_custom_call.1} parent=1 // pred_region
      %s1394 = ssub.s32 32, 32
      %1395 = vsyncadd [#allocation4], %s1394
      %s1397 = sshll.u32 [#allocation3], 4
      %s1398 = int_to_ptr.vmem [resolvable:$true] %s1397
      %1400 = dma.vmem_to_hbm [thread:$0]  %s1398, 32, %s3, [#allocation4]
    $region25: #{tpu_custom_call.1} parent=1 // pred_fallthru
      _
    // Predicated region
    $region26: #{tpu_custom_call.1} parent=1 // pred_check
      _
    $region27: #{tpu_custom_call.1} parent=1 // pred_check_branch
      %1402 = sbr.rel (0) target = $region29
    $region28: #{tpu_custom_call.1} parent=1 // pred_region
      %1403 = dma.done [#allocation4], 32
    $region29: #{tpu_custom_call.1} parent=1 // pred_fallthru
      _
    %1404 = vsyncpa [#allocation4], 1

</llo_original>
